<compile_context>
chip_gen: v5e
topology: v5e:2x2
jax: 0.10.0
libtpu: 0.0.40
codegen_flags: <defaults>
</compile_context>

<pallas_src>
import jax
import jax.numpy as jnp
from jax.experimental import pallas as pl
from jax.experimental.pallas import tpu as pltpu


def resnet_kernel(x_ref, wt_ref, b_ref, o_ref):
    # x_ref:  (TILE_N, H)   current batch tile
    # wt_ref: (H, H)        W^T (pre-transposed), resident across grid steps
    # b_ref:  (1, H)        bias, resident across grid steps
    # o_ref:  (TILE_N, H)
    x = x_ref[...]
    # Linear: y = x @ W^T + b   (MXU matmul, f32 accumulation — no transpose here)
    y = jnp.dot(x, wt_ref[...], preferred_element_type=jnp.float32)
    y = y + b_ref[...].astype(jnp.float32)
    # Residual epilogue: tanh on the EUP, skip-add on the VPU, both in f32.
    o_ref[...] = (jnp.tanh(y) + x.astype(jnp.float32)).astype(o_ref.dtype)


def resnet_forward(x, w, b, *, tile_n=256):
    """out = tanh(x @ W^T + b) + x, tiled over the batch dimension.

    x: (N, H)    w: (H, H) in PyTorch [out_features, in_features] layout
    b: (H,)
    """
    n, h_in = x.shape
    h_out, h_in2 = w.shape
    assert h_in == h_in2 and h_out == h_in, "residual block requires square Linear"

    # One-time relayout outside the kernel: kernel contracts along W^T's rows,
    # so the MXU is the only unit that ever touches W inside the kernel.
    wt = w.T                      # (H_in, H_out)
    b2d = b.reshape(1, h_out)

    if n <= tile_n:
        tile_n = n                # full-array block (always legal)
    assert tile_n % 8 == 0 or tile_n == n, "TILE_N must be a multiple of 8"
    grid_n = pl.cdiv(n, tile_n)

    itemsize = jnp.dtype(x.dtype).itemsize
    cost = pl.CostEstimate(
        flops=2 * n * h_in * h_out,
        transcendentals=n * h_out,
        bytes_accessed=itemsize * (2 * n * h_out) + 4 * (h_in * h_out + h_out),
    )

    return pl.pallas_call(
        resnet_kernel,
        out_shape=jax.ShapeDtypeStruct((n, h_out), x.dtype),
        grid_spec=pltpu.PrefetchScalarGridSpec(
            num_scalar_prefetch=0,
            grid=(grid_n,),
            in_specs=[
                pl.BlockSpec((tile_n, h_in), lambda i: (i, 0)),   # x tile (streamed)
                pl.BlockSpec((h_in, h_out), lambda i: (0, 0)),    # W^T (resident)
                pl.BlockSpec((1, h_out), lambda i: (0, 0)),       # bias (resident)
            ],
            out_specs=pl.BlockSpec((tile_n, h_out), lambda i: (i, 0)),
        ),
        compiler_params=pltpu.CompilerParams(
            # batch axis is independent -> megacore-shardable on v7x
            dimension_semantics=("parallel",),
        ),
        cost_estimate=cost,
    )(x, wt, b2d)


def reference_forward(x, w, b):
    return jnp.tanh(x @ w.T + b) + x


if __name__ == "__main__":
    key = jax.random.PRNGKey(0)
    kx, kw, kb = jax.random.split(key, 3)

    # Lane-dense demo shapes: N=512 (two 256-row grid tiles), H=128.
    N, H = 512, 128
    x = jax.random.normal(kx, (N, H), dtype=jnp.float32)
    w = jax.random.normal(kw, (H, H), dtype=jnp.float32) * (1.0 / jnp.sqrt(H))
    b = jax.random.normal(kb, (H,), dtype=jnp.float32) * 0.01

    out = jax.block_until_ready(resnet_forward(x, w, b))
    ref = reference_forward(x, w, b)
    assert out.shape == (N, H)
    assert jnp.allclose(out, ref, atol=2e-5, rtol=2e-5), "mismatch vs reference"

    # Tiny-shape sanity check (full-array blocks, matches original spec sizes).
    Ns, Hs = 8, 32
    xs = jax.random.normal(kx, (Ns, Hs), dtype=jnp.float32)
    ws = jax.random.normal(kw, (Hs, Hs), dtype=jnp.float32) * (1.0 / jnp.sqrt(Hs))
    bs = jax.random.normal(kb, (Hs,), dtype=jnp.float32) * 0.01
    outs = jax.block_until_ready(resnet_forward(xs, ws, bs))
    refs = reference_forward(xs, ws, bs)
    assert jnp.allclose(outs, refs, atol=2e-5, rtol=2e-5), "mismatch (small shapes)"

    print("KERNEL_OK")
</pallas_src>

<mosaic_0001>
module attributes {stable_mosaic.version = 11 : i64} {
  func.func @resnet_kernel(%arg0: i32, %arg1: memref<256x128xf32, #tpu.memory_space<vmem>>, %arg2: memref<128x128xf32, #tpu.memory_space<vmem>>, %arg3: memref<1x128xf32, #tpu.memory_space<vmem>>, %arg4: memref<256x128xf32, #tpu.memory_space<vmem>>) attributes {dimension_semantics = [#tpu.dimension_semantics<parallel>], iteration_bounds = array<i64: 2>, scalar_prefetch = 0 : i64, scratch_operands = 0 : i64, tpu.core_type = #tpu.core_type<tc>, window_params = [{transform_indices = @transform_0, window_bounds = array<i64: 256, 128>}, {pipeline_mode = #tpu.pipeline_mode<synchronous>, transform_indices = @transform_1, window_bounds = array<i64: 128, 128>}, {pipeline_mode = #tpu.pipeline_mode<synchronous>, transform_indices = @transform_2, window_bounds = array<i64: 1, 128>}, {transform_indices = @transform_3, window_bounds = array<i64: 256, 128>}]} {
    %c0 = arith.constant 0 : index
    %c0_0 = arith.constant 0 : index
    %0 = vector.load %arg1[%c0, %c0_0] : memref<256x128xf32, #tpu.memory_space<vmem>>, vector<256x128xf32>
    %c0_1 = arith.constant 0 : index
    %c0_2 = arith.constant 0 : index
    %1 = vector.load %arg2[%c0_1, %c0_2] : memref<128x128xf32, #tpu.memory_space<vmem>>, vector<128x128xf32>
    %cst = arith.constant dense<0.000000e+00> : vector<256x128xf32>
    %2 = tpu.matmul %0, %1, %cst {dimension_numbers = #tpu.dot_dimension_numbers<[1], [0], [0], [1], [0, 0, 1, 1], [], []>} : vector<256x128xf32>, vector<128x128xf32>, vector<256x128xf32> -> vector<256x128xf32>
    %c0_3 = arith.constant 0 : index
    %c0_4 = arith.constant 0 : index
    %3 = vector.load %arg3[%c0_3, %c0_4] : memref<1x128xf32, #tpu.memory_space<vmem>>, vector<1x128xf32>
    %4 = vector.broadcast %3 : vector<1x128xf32> to vector<256x128xf32>
    %5 = arith.addf %2, %4 : vector<256x128xf32>
    %6 = math.tanh %5 : vector<256x128xf32>
    %7 = arith.addf %6, %0 : vector<256x128xf32>
    %c0_5 = arith.constant 0 : index
    %c0_6 = arith.constant 0 : index
    %8 = vector.load %arg4[%c0_5, %c0_6] : memref<256x128xf32, #tpu.memory_space<vmem>>, vector<256x128xf32>
    tpu.vector_store %arg4[%c0_5, %c0_6], %7 {strides = array<i32>} : memref<256x128xf32, #tpu.memory_space<vmem>>, vector<256x128xf32>,
    return
  }
  func.func @transform_0(%arg0: i32) -> (i32, i32) {
    %c0_i32 = arith.constant 0 : i32
    %c0_i32_0 = arith.constant 0 : i32
    return %arg0, %c0_i32 : i32, i32
  }
  func.func @transform_1(%arg0: i32) -> (i32, i32) {
    %c0_i32 = arith.constant 0 : i32
    %c0_i32_0 = arith.constant 0 : i32
    %c0_i32_1 = arith.constant 0 : i32
    return %c0_i32, %c0_i32_0 : i32, i32
  }
  func.func @transform_2(%arg0: i32) -> (i32, i32) {
    %c0_i32 = arith.constant 0 : i32
    %c0_i32_0 = arith.constant 0 : i32
    %c0_i32_1 = arith.constant 0 : i32
    return %c0_i32, %c0_i32_0 : i32, i32
  }
  func.func @transform_3(%arg0: i32) -> (i32, i32) {
    %c0_i32 = arith.constant 0 : i32
    %c0_i32_0 = arith.constant 0 : i32
    return %arg0, %c0_i32 : i32, i32
  }
}

</mosaic_0001>

<llo_original>
// kernel: tpu_custom_call.1
$region0: #{tpu_custom_call.1}
  #allocation0 [shape = 'u32[]', space=smem, size = 0x4, offset = 0x4, fixed_abs, tag = 'smem constant byte address 0x4 - core index']
  #allocation1 [shape = 'u32[72,128]{1,0:T(1,128)}', space=vmem, size = 0x9000, scoped, tag = 'internal scratch']
  %s0 = inlined_call_operand.hbm [shape: f32[512,128], index: 0, kind: input, shape index: {}]
  %s1 = inlined_call_operand.hbm [shape: f32[128,128], index: 1, kind: input, shape index: {}]
  %s2 = inlined_call_operand.vmem [shape: f32[1,128], index: 2, kind: input, shape index: {}]
  %s3 = inlined_call_operand.hbm [shape: f32[512,128], index: 3, kind: output, shape index: {}]
  %s4 = sld [smem:[#allocation0]]
  $region53: #{tpu_custom_call.1} parent=0
    _
  %s6 = ssub.s32 1, %s4
  %s7 = scalar_select 0, %s6, %s4
  $region1: #{tpu_custom_call.1} parent=0
    #allocation2 [shape = 'u8[262144]{0}', space=vmem, size = 0x40000, scoped, tag = 'input window, operand 0']
    #allocation3 [shape = 's32[2]{0}', space=sflag, size = 0x8, scoped, tag = 'scoped memory for tpu_custom_call.1']
    #allocation4 [shape = 's32[2]{0}', space=sflag, size = 0x8, scoped, tag = 'scoped memory for tpu_custom_call.1']
    #allocation5 [shape = 'u8[65536]{0}', space=vmem, size = 0x10000, scoped, tag = 'input window, operand 1, single buffered']
    #allocation6 [shape = 's32[1]{0}', space=sflag, size = 0x4, scoped, tag = 'scoped memory for tpu_custom_call.1']
    #allocation7 [shape = 'u8[262144]{0}', space=vmem, size = 0x40000, scoped, tag = 'output window, operand 0']
    %8 = vsyncpa [#allocation3], 0
    %s9 = scalar_lea.sflag [#allocation3], 1
    %10 = vsyncpa %s9, 0
    %11 = vsyncpa [#allocation6], 0
    %12 = vsyncpa [#allocation4], 0
    %s13 = scalar_lea.sflag [#allocation4], 1
    %14 = vsyncpa %s13, 0
    loop: start=0, step=1, limit=4
    $region2: #{tpu_custom_call.1} parent=1 // loop_pre_header
      _
    $region3: #{tpu_custom_call.1} parent=1 // loop_header
      %s16 = sphi 0, %s20
      %p17 = scmp.ge.s32.totalorder %s16, 4
      %s26 = sphi 0, %s28
      %s29 = sphi 0, %s26
      %s30 = sphi 0, %s29
      %s46 = sphi 0, %s30
      %s50 = sphi 0, %s50
      %s52 = sphi 0, %s50
      %s53 = sphi 0, %s52
      %s67 = sphi 0, %s53
      %s71 = sphi 0, %s71
      %s73 = sphi 0, %s71
      %s74 = sphi 0, %s73
      %s88 = sphi 0, %s74
      %s94 = sphi 0, %s96
      %s97 = sphi 0, %s94
      %s98 = sphi 0, %s97
      %s114 = sphi 0, %s98
    $region4: #{tpu_custom_call.1} parent=1 // loop_header_branch
      %19 = sbr.rel (%p17) target = $region8
    $region5: #{tpu_custom_call.1} parent=1 // loop_body
      %s21 = ssub.s32 %s16, 1
      %s22 = ssub.s32 %s16, 2
      %s23 = sadd.s32 %s16, 1
      %s24 = ssub.s32 %s16, %s23
      %p25 = scmp.eq.s32.totalorder %s24, 0
      %s27 = sadd.s32 %s26, 1
      %s28 = scalar_select %p25, %s26, %s27
      %p31 = pneg %p25
      %p32 = scmp.eq.s32.totalorder %s16, 1
      %p33 = por %p31, %p32
      %p34 = scmp.ne.s32.totalorder %s26, %s29
      %p35 = scmp.eq.s32.totalorder %s16, 0
      %p36 = por %p34, %p35
      %p37 = scmp.ne.s32.totalorder %s26, %s29
      %p38 = scmp.eq.s32.totalorder %s21, 1
      %p39 = por %p37, %p38
      %p40 = scmp.ne.s32.totalorder %s29, %s30
      %p41 = scmp.eq.s32.totalorder %s21, 0
      %p42 = por %p40, %p41
      %p43 = scmp.ne.s32.totalorder %s29, %s30
      %p44 = scmp.eq.s32.totalorder %s22, 1
      %p45 = por %p43, %p44
      %p47 = scmp.ne.s32.totalorder %s30, %s46
      %p48 = scmp.eq.s32.totalorder %s22, 0
      %p49 = por %p47, %p48
      %s51 = sadd.s32 %s50, 1
      %p54 = scmp.eq.s32.totalorder %s16, 1
      %p55 = scmp.ne.s32.totalorder %s50, %s52
      %p56 = scmp.eq.s32.totalorder %s16, 0
      %p57 = por %p55, %p56
      %p58 = scmp.ne.s32.totalorder %s50, %s52
      %p59 = scmp.eq.s32.totalorder %s21, 1
      %p60 = por %p58, %p59
      %p61 = scmp.ne.s32.totalorder %s52, %s53
      %p62 = scmp.eq.s32.totalorder %s21, 0
      %p63 = por %p61, %p62
      %p64 = scmp.ne.s32.totalorder %s52, %s53
      %p65 = scmp.eq.s32.totalorder %s22, 1
      %p66 = por %p64, %p65
      %p68 = scmp.ne.s32.totalorder %s53, %s67
      %p69 = scmp.eq.s32.totalorder %s22, 0
      %p70 = por %p68, %p69
      %s72 = sadd.s32 %s71, 1
      %p75 = scmp.eq.s32.totalorder %s16, 1
      %p76 = scmp.ne.s32.totalorder %s71, %s73
      %p77 = scmp.eq.s32.totalorder %s16, 0
      %p78 = por %p76, %p77
      %p79 = scmp.ne.s32.totalorder %s71, %s73
      %p80 = scmp.eq.s32.totalorder %s21, 1
      %p81 = por %p79, %p80
      %p82 = scmp.ne.s32.totalorder %s73, %s74
      %p83 = scmp.eq.s32.totalorder %s21, 0
      %p84 = por %p82, %p83
      %p85 = scmp.ne.s32.totalorder %s73, %s74
      %p86 = scmp.eq.s32.totalorder %s22, 1
      %p87 = por %p85, %p86
      %p89 = scmp.ne.s32.totalorder %s74, %s88
      %p90 = scmp.eq.s32.totalorder %s22, 0
      %p91 = por %p89, %p90
      %s92 = ssub.s32 %s16, %s23
      %p93 = scmp.eq.s32.totalorder %s92, 0
      %s95 = sadd.s32 %s94, 1
      %s96 = scalar_select %p93, %s94, %s95
      %p99 = pneg %p93
      %p100 = scmp.eq.s32.totalorder %s16, 1
      %p101 = por %p99, %p100
      %p102 = scmp.ne.s32.totalorder %s94, %s97
      %p103 = scmp.eq.s32.totalorder %s16, 0
      %p104 = por %p102, %p103
      %p105 = scmp.ne.s32.totalorder %s94, %s97
      %p106 = scmp.eq.s32.totalorder %s21, 1
      %p107 = por %p105, %p106
      %p108 = scmp.ne.s32.totalorder %s97, %s98
      %p109 = scmp.eq.s32.totalorder %s21, 0
      %p110 = por %p108, %p109
      %p111 = scmp.ne.s32.totalorder %s97, %s98
      %p112 = scmp.eq.s32.totalorder %s22, 1
      %p113 = por %p111, %p112
      %p115 = scmp.ne.s32.totalorder %s98, %s114
      %p116 = scmp.eq.s32.totalorder %s22, 0
      %p117 = por %p115, %p116
      %p118 = scmp.le.s32.totalorder 1, %s16
      %p119 = scmp.lt.s32.totalorder %s16, 3
      %p120 = pnand %p118, %p119
      %p121 = pneg %p120
      // Predicated region
      $region9: #{tpu_custom_call.1} parent=5 // pred_check
        _
      $region10: #{tpu_custom_call.1} parent=5 // pred_check_branch
        %123 = sbr.rel (%p120) target = $region12
      $region11: #{tpu_custom_call.1} parent=5 // pred_region
        %s124 = ssub.s32 %s16, 1
        // Predicated region
        $region13: #{tpu_custom_call.1} parent=11 // pred_check
          %p125 = pneg %p63
        $region14: #{tpu_custom_call.1} parent=11 // pred_check_branch
          %127 = sbr.rel (%p125) target = $region16
        $region15: #{tpu_custom_call.1} parent=11 // pred_region
          %129 = vsyncadd [#allocation6], 0
          %s130 = sshll.u32 %s1, 4
          %s131 = int_to_ptr.hbm [resolvable:$true] %s130
          %s132 = sshll.u32 [#allocation5], 4
          %s133 = int_to_ptr.vmem [resolvable:$true] %s132
          %138 = dma.hbm_to_vmem [thread:$0]  %s131, 2048, %s133, [#allocation6], 128, 128, 8
        $region16: #{tpu_custom_call.1} parent=11 // pred_fallthru
          _
        // Predicated region
        $region17: #{tpu_custom_call.1} parent=11 // pred_check
          %p139 = pneg %p84
        $region18: #{tpu_custom_call.1} parent=11 // pred_check_branch
          %141 = sbr.rel (%p139) target = $region20
        $region19: #{tpu_custom_call.1} parent=11 // pred_region
          _
        $region20: #{tpu_custom_call.1} parent=11 // pred_fallthru
          _
      $region12: #{tpu_custom_call.1} parent=5 // pred_fallthru
        _
      %p142 = scmp.lt.s32.totalorder %s16, 2
      // Predicated region
      $region21: #{tpu_custom_call.1} parent=5 // pred_check
        %p143 = pneg %p142
      $region22: #{tpu_custom_call.1} parent=5 // pred_check_branch
        %145 = sbr.rel (%p143) target = $region24
      $region23: #{tpu_custom_call.1} parent=5 // pred_region
        // Predicated region
        $region25: #{tpu_custom_call.1} parent=23 // pred_check
          %p146 = pneg %p36
        $region26: #{tpu_custom_call.1} parent=23 // pred_check_branch
          %148 = sbr.rel (%p146) target = $region28
        $region27: #{tpu_custom_call.1} parent=23 // pred_region
          %s149 = sand.u32 %s26, 1
          %s150 = scalar_lea.sflag [#allocation3], %s149
          %s151 = sand.u32 %s26, 1
          %s152 = smul.addr %s151, 256
          %s153 = scalar_lea.vmem [#allocation2], %s152
          %s154 = smul.u32 32, %s16
          %156 = vsyncadd %s150, 0
          %s157 = smul.addr %s154, 8
          %s158 = scalar_lea.hbm %s0, %s157
          %s159 = sshll.u32 %s158, 4
          %s160 = int_to_ptr.hbm [resolvable:$true] %s159
          %s161 = sshll.u32 %s153, 4
          %s162 = int_to_ptr.vmem [resolvable:$true] %s161
          %167 = dma.hbm_to_vmem [thread:$0]  %s160, 4096, %s162, %s150, 128, 128, 8
        $region28: #{tpu_custom_call.1} parent=23 // pred_fallthru
          _
      $region24: #{tpu_custom_call.1} parent=5 // pred_fallthru
        _
      %p168 = scmp.le.s32.totalorder 1, %s16
      %p169 = scmp.lt.s32.totalorder %s16, 3
      %p170 = pnand %p168, %p169
      %p171 = pneg %p170
      // Predicated region
      $region29: #{tpu_custom_call.1} parent=5 // pred_check
        _
      $region30: #{tpu_custom_call.1} parent=5 // pred_check_branch
        %173 = sbr.rel (%p170) target = $region32
      $region31: #{tpu_custom_call.1} parent=5 // pred_region
        %s174 = ssub.s32 %s16, 1
        %s175 = sand.u32 %s29, 1
        %s176 = scalar_lea.sflag [#allocation3], %s175
        %s177 = sand.u32 %s29, 1
        %s178 = smul.addr %s177, 256
        %s179 = scalar_lea.vmem [#allocation2], %s178
        // Predicated region
        $region33: #{tpu_custom_call.1} parent=31 // pred_check
          %p180 = pneg %p42
        $region34: #{tpu_custom_call.1} parent=31 // pred_check_branch
          %182 = sbr.rel (%p180) target = $region36
        $region35: #{tpu_custom_call.1} parent=31 // pred_region
          %184 = dma.done %s176, 4096
        $region36: #{tpu_custom_call.1} parent=31 // pred_fallthru
          _
        // Predicated region
        $region37: #{tpu_custom_call.1} parent=31 // pred_check
          %p185 = pneg %p63
        $region38: #{tpu_custom_call.1} parent=31 // pred_check_branch
          %187 = sbr.rel (%p185) target = $region40
        $region39: #{tpu_custom_call.1} parent=31 // pred_region
          %189 = dma.done [#allocation6], 2048
        $region40: #{tpu_custom_call.1} parent=31 // pred_fallthru
          _
        %s190 = sand.u32 %s29, 1
        %s191 = scalar_lea.sflag [#allocation3], %s190
        %s192 = sand.u32 %s29, 1
        %s193 = smul.addr %s192, 256
        %s194 = scalar_lea.vmem [#allocation2], %s193
        %p195 = pneg %p42
        %p196 = pneg %p39
        %p197 = pneg %p63
        %p198 = pneg %p60
        %p199 = pneg %p84
        %p200 = pneg %p81
        %p201 = pneg %p110
        %p202 = pneg %p107
        %s203 = sand.u32 %s97, 1
        %s204 = scalar_lea.sflag [#allocation4], %s203
        %s205 = sand.u32 %s97, 1
        %s206 = smul.addr %s205, 256
        %s207 = scalar_lea.vmem [#allocation7], %s206
        %s208 = smul.u32 32, %s21
        %s209 = smul.u32 32, %s21
        %v210 = vld [vmem:[%s179] sm:$0xff]
        %v211 = vld [vmem:[%s179 + $0x8] sm:$0xff]
        %v212 = vld [vmem:[%s179 + $0x10] sm:$0xff]
        %v213 = vld [vmem:[%s179 + $0x18] sm:$0xff]
        %v214 = vld [vmem:[%s179 + $0x20] sm:$0xff]
        %v215 = vld [vmem:[%s179 + $0x28] sm:$0xff]
        %v216 = vld [vmem:[%s179 + $0x30] sm:$0xff]
        %v217 = vld [vmem:[%s179 + $0x38] sm:$0xff]
        %v218 = vld [vmem:[%s179 + $0x40] sm:$0xff]
        %v219 = vld [vmem:[%s179 + $0x48] sm:$0xff]
        %v220 = vld [vmem:[%s179 + $0x50] sm:$0xff]
        %v221 = vld [vmem:[%s179 + $0x58] sm:$0xff]
        %v222 = vld [vmem:[%s179 + $0x60] sm:$0xff]
        %v223 = vld [vmem:[%s179 + $0x68] sm:$0xff]
        %v224 = vld [vmem:[%s179 + $0x70] sm:$0xff]
        %v225 = vld [vmem:[%s179 + $0x78] sm:$0xff]
        %v226 = vld [vmem:[%s179 + $0x80] sm:$0xff]
        %v227 = vld [vmem:[%s179 + $0x88] sm:$0xff]
        %v228 = vld [vmem:[%s179 + $0x90] sm:$0xff]
        %v229 = vld [vmem:[%s179 + $0x98] sm:$0xff]
        %v230 = vld [vmem:[%s179 + $0xa0] sm:$0xff]
        %v231 = vld [vmem:[%s179 + $0xa8] sm:$0xff]
        %v232 = vld [vmem:[%s179 + $0xb0] sm:$0xff]
        %v233 = vld [vmem:[%s179 + $0xb8] sm:$0xff]
        %v234 = vld [vmem:[%s179 + $0xc0] sm:$0xff]
        %v235 = vld [vmem:[%s179 + $0xc8] sm:$0xff]
        %v236 = vld [vmem:[%s179 + $0xd0] sm:$0xff]
        %v237 = vld [vmem:[%s179 + $0xd8] sm:$0xff]
        %v238 = vld [vmem:[%s179 + $0xe0] sm:$0xff]
        %v239 = vld [vmem:[%s179 + $0xe8] sm:$0xff]
        %v240 = vld [vmem:[%s179 + $0xf0] sm:$0xff]
        %v241 = vld [vmem:[%s179 + $0xf8] sm:$0xff]
        %v242 = vld [vmem:[#allocation5] sm:$0xff]
        %v243 = vld [vmem:[#allocation5 + $0x8] sm:$0xff]
        %v244 = vld [vmem:[#allocation5 + $0x10] sm:$0xff]
        %v245 = vld [vmem:[#allocation5 + $0x18] sm:$0xff]
        %v246 = vld [vmem:[#allocation5 + $0x20] sm:$0xff]
        %v247 = vld [vmem:[#allocation5 + $0x28] sm:$0xff]
        %v248 = vld [vmem:[#allocation5 + $0x30] sm:$0xff]
        %v249 = vld [vmem:[#allocation5 + $0x38] sm:$0xff]
        %v250 = vld [vmem:[#allocation5 + $0x40] sm:$0xff]
        %v251 = vld [vmem:[#allocation5 + $0x48] sm:$0xff]
        %v252 = vld [vmem:[#allocation5 + $0x50] sm:$0xff]
        %v253 = vld [vmem:[#allocation5 + $0x58] sm:$0xff]
        %v254 = vld [vmem:[#allocation5 + $0x60] sm:$0xff]
        %v255 = vld [vmem:[#allocation5 + $0x68] sm:$0xff]
        %v256 = vld [vmem:[#allocation5 + $0x70] sm:$0xff]
        %v257 = vld [vmem:[#allocation5 + $0x78] sm:$0xff]
        %v258 = vld [vmem:[%s2] sm:$0x1]
        %v260 = vperm.slane %v258, 0
        %262 = vmatpush.msra.mxu0 %v257
        %263 = vmatpush.msra.mxu0 %v256
        %264 = vmatpush.msra.mxu0 %v255
        %265 = vmatpush.msra.mxu0 %v254
        %266 = vmatpush.msra.mxu0 %v253
        %267 = vmatpush.msra.mxu0 %v252
        %268 = vmatpush.msra.mxu0 %v251
        %269 = vmatpush.msra.mxu0 %v250
        %270 = vmatpush.msra.mxu0 %v249
        %271 = vmatpush.msra.mxu0 %v248
        %272 = vmatpush.msra.mxu0 %v247
        %273 = vmatpush.msra.mxu0 %v246
        %274 = vmatpush.msra.mxu0 %v245
        %275 = vmatpush.msra.mxu0 %v244
        %276 = vmatpush.msra.mxu0 %v243
        %277 = vmatpush.msra.mxu0 %v242
        %278 = vmatmul.f32.gmra.mxu0 %v210
        %v279 = vpop.f32.mrf.mxu0
        %v280 = vadd.f32 %v260, %v279
        %281 = vmatmul.f32.gmra.mxu0 %v211
        %v282 = vpop.f32.mrf.mxu0
        %v283 = vadd.f32 %v260, %v282
        %284 = vmatmul.f32.gmra.mxu0 %v212
        %v285 = vpop.f32.mrf.mxu0
        %v286 = vadd.f32 %v260, %v285
        %287 = vmatmul.f32.gmra.mxu0 %v213
        %v288 = vpop.f32.mrf.mxu0
        %v289 = vadd.f32 %v260, %v288
        %290 = vmatmul.f32.gmra.mxu0 %v214
        %v291 = vpop.f32.mrf.mxu0
        %v292 = vadd.f32 %v260, %v291
        %293 = vmatmul.f32.gmra.mxu0 %v215
        %v294 = vpop.f32.mrf.mxu0
        %v295 = vadd.f32 %v260, %v294
        %296 = vmatmul.f32.gmra.mxu0 %v216
        %v297 = vpop.f32.mrf.mxu0
        %v298 = vadd.f32 %v260, %v297
        %299 = vmatmul.f32.gmra.mxu0 %v217
        %v300 = vpop.f32.mrf.mxu0
        %v301 = vadd.f32 %v260, %v300
        %302 = vmatmul.f32.gmra.mxu0 %v218
        %v303 = vpop.f32.mrf.mxu0
        %v304 = vadd.f32 %v260, %v303
        %305 = vmatmul.f32.gmra.mxu0 %v219
        %v306 = vpop.f32.mrf.mxu0
        %v307 = vadd.f32 %v260, %v306
        %308 = vmatmul.f32.gmra.mxu0 %v220
        %v309 = vpop.f32.mrf.mxu0
        %v310 = vadd.f32 %v260, %v309
        %311 = vmatmul.f32.gmra.mxu0 %v221
        %v312 = vpop.f32.mrf.mxu0
        %v313 = vadd.f32 %v260, %v312
        %314 = vmatmul.f32.gmra.mxu0 %v222
        %v315 = vpop.f32.mrf.mxu0
        %v316 = vadd.f32 %v260, %v315
        %317 = vmatmul.f32.gmra.mxu0 %v223
        %v318 = vpop.f32.mrf.mxu0
        %v319 = vadd.f32 %v260, %v318
        %320 = vmatmul.f32.gmra.mxu0 %v224
        %v321 = vpop.f32.mrf.mxu0
        %v322 = vadd.f32 %v260, %v321
        %323 = vmatmul.f32.gmra.mxu0 %v225
        %v324 = vpop.f32.mrf.mxu0
        %v325 = vadd.f32 %v260, %v324
        %326 = vmatmul.f32.gmra.mxu0 %v226
        %v327 = vpop.f32.mrf.mxu0
        %v328 = vadd.f32 %v260, %v327
        %329 = vmatmul.f32.gmra.mxu0 %v227
        %v330 = vpop.f32.mrf.mxu0
        %v331 = vadd.f32 %v260, %v330
        %332 = vmatmul.f32.gmra.mxu0 %v228
        %v333 = vpop.f32.mrf.mxu0
        %v334 = vadd.f32 %v260, %v333
        %335 = vmatmul.f32.gmra.mxu0 %v229
        %v336 = vpop.f32.mrf.mxu0
        %v337 = vadd.f32 %v260, %v336
        %338 = vmatmul.f32.gmra.mxu0 %v230
        %v339 = vpop.f32.mrf.mxu0
        %v340 = vadd.f32 %v260, %v339
        %341 = vmatmul.f32.gmra.mxu0 %v231
        %v342 = vpop.f32.mrf.mxu0
        %v343 = vadd.f32 %v260, %v342
        %344 = vmatmul.f32.gmra.mxu0 %v232
        %v345 = vpop.f32.mrf.mxu0
        %v346 = vadd.f32 %v260, %v345
        %347 = vmatmul.f32.gmra.mxu0 %v233
        %v348 = vpop.f32.mrf.mxu0
        %v349 = vadd.f32 %v260, %v348
        %350 = vmatmul.f32.gmra.mxu0 %v234
        %v351 = vpop.f32.mrf.mxu0
        %v352 = vadd.f32 %v260, %v351
        %353 = vmatmul.f32.gmra.mxu0 %v235
        %v354 = vpop.f32.mrf.mxu0
        %v355 = vadd.f32 %v260, %v354
        %356 = vmatmul.f32.gmra.mxu0 %v236
        %v357 = vpop.f32.mrf.mxu0
        %v358 = vadd.f32 %v260, %v357
        %359 = vmatmul.f32.gmra.mxu0 %v237
        %v360 = vpop.f32.mrf.mxu0
        %v361 = vadd.f32 %v260, %v360
        %362 = vmatmul.f32.gmra.mxu0 %v238
        %v363 = vpop.f32.mrf.mxu0
        %v364 = vadd.f32 %v260, %v363
        %365 = vmatmul.f32.gmra.mxu0 %v239
        %v366 = vpop.f32.mrf.mxu0
        %v367 = vadd.f32 %v260, %v366
        %368 = vmatmul.f32.gmra.mxu0 %v240
        %v369 = vpop.f32.mrf.mxu0
        %v370 = vadd.f32 %v260, %v369
        %371 = vmatmul.f32.gmra.mxu0 %v241
        %v372 = vpop.f32.mrf.mxu0
        %v373 = vadd.f32 %v260, %v372
        %374 = vdwg.mxu0
        %v375 = vtanh.pop %v280
        %v376 = vtanh.pop %v283
        %v377 = vtanh.pop %v286
        %v378 = vtanh.pop %v289
        %v379 = vtanh.pop %v292
        %v380 = vtanh.pop %v295
        %v381 = vtanh.pop %v298
        %v382 = vtanh.pop %v301
        %v383 = vtanh.pop %v304
        %v384 = vtanh.pop %v307
        %v385 = vtanh.pop %v310
        %v386 = vtanh.pop %v313
        %v387 = vtanh.pop %v316
        %v388 = vtanh.pop %v319
        %v389 = vtanh.pop %v322
        %v390 = vtanh.pop %v325
        %v391 = vtanh.pop %v328
        %v392 = vtanh.pop %v331
        %v393 = vtanh.pop %v334
        %v394 = vtanh.pop %v337
        %v395 = vtanh.pop %v340
        %v396 = vtanh.pop %v343
        %v397 = vtanh.pop %v346
        %v398 = vtanh.pop %v349
        %v399 = vtanh.pop %v352
        %v400 = vtanh.pop %v355
        %v401 = vtanh.pop %v358
        %v402 = vtanh.pop %v361
        %v403 = vtanh.pop %v364
        %v404 = vtanh.pop %v367
        %v405 = vtanh.pop %v370
        %v406 = vtanh.pop %v373
        %v407 = vadd.f32 %v375, %v210
        %v408 = vadd.f32 %v376, %v211
        %v409 = vadd.f32 %v377, %v212
        %v410 = vadd.f32 %v378, %v213
        %v411 = vadd.f32 %v379, %v214
        %v412 = vadd.f32 %v380, %v215
        %v413 = vadd.f32 %v381, %v216
        %v414 = vadd.f32 %v382, %v217
        %v415 = vadd.f32 %v383, %v218
        %v416 = vadd.f32 %v384, %v219
        %v417 = vadd.f32 %v385, %v220
        %v418 = vadd.f32 %v386, %v221
        %v419 = vadd.f32 %v387, %v222
        %v420 = vadd.f32 %v388, %v223
        %v421 = vadd.f32 %v389, %v224
        %v422 = vadd.f32 %v390, %v225
        %v423 = vadd.f32 %v391, %v226
        %v424 = vadd.f32 %v392, %v227
        %v425 = vadd.f32 %v393, %v228
        %v426 = vadd.f32 %v394, %v229
        %v427 = vadd.f32 %v395, %v230
        %v428 = vadd.f32 %v396, %v231
        %v429 = vadd.f32 %v397, %v232
        %v430 = vadd.f32 %v398, %v233
        %v431 = vadd.f32 %v399, %v234
        %v432 = vadd.f32 %v400, %v235
        %v433 = vadd.f32 %v401, %v236
        %v434 = vadd.f32 %v402, %v237
        %v435 = vadd.f32 %v403, %v238
        %v436 = vadd.f32 %v404, %v239
        %v437 = vadd.f32 %v405, %v240
        %v438 = vadd.f32 %v406, %v241
        %439 = vst [vmem:[%s207] sm:$0xff] %v407
        %440 = vst [vmem:[%s207 + $0x8] sm:$0xff] %v408
        %441 = vst [vmem:[%s207 + $0x10] sm:$0xff] %v409
        %442 = vst [vmem:[%s207 + $0x18] sm:$0xff] %v410
        %443 = vst [vmem:[%s207 + $0x20] sm:$0xff] %v411
        %444 = vst [vmem:[%s207 + $0x28] sm:$0xff] %v412
        %445 = vst [vmem:[%s207 + $0x30] sm:$0xff] %v413
        %446 = vst [vmem:[%s207 + $0x38] sm:$0xff] %v414
        %447 = vst [vmem:[%s207 + $0x40] sm:$0xff] %v415
        %448 = vst [vmem:[%s207 + $0x48] sm:$0xff] %v416
        %449 = vst [vmem:[%s207 + $0x50] sm:$0xff] %v417
        %450 = vst [vmem:[%s207 + $0x58] sm:$0xff] %v418
        %451 = vst [vmem:[%s207 + $0x60] sm:$0xff] %v419
        %452 = vst [vmem:[%s207 + $0x68] sm:$0xff] %v420
        %453 = vst [vmem:[%s207 + $0x70] sm:$0xff] %v421
        %454 = vst [vmem:[%s207 + $0x78] sm:$0xff] %v422
        %455 = vst [vmem:[%s207 + $0x80] sm:$0xff] %v423
        %456 = vst [vmem:[%s207 + $0x88] sm:$0xff] %v424
        %457 = vst [vmem:[%s207 + $0x90] sm:$0xff] %v425
        %458 = vst [vmem:[%s207 + $0x98] sm:$0xff] %v426
        %459 = vst [vmem:[%s207 + $0xa0] sm:$0xff] %v427
        %460 = vst [vmem:[%s207 + $0xa8] sm:$0xff] %v428
        %461 = vst [vmem:[%s207 + $0xb0] sm:$0xff] %v429
        %462 = vst [vmem:[%s207 + $0xb8] sm:$0xff] %v430
        %463 = vst [vmem:[%s207 + $0xc0] sm:$0xff] %v431
        %464 = vst [vmem:[%s207 + $0xc8] sm:$0xff] %v432
        %465 = vst [vmem:[%s207 + $0xd0] sm:$0xff] %v433
        %466 = vst [vmem:[%s207 + $0xd8] sm:$0xff] %v434
        %467 = vst [vmem:[%s207 + $0xe0] sm:$0xff] %v435
        %468 = vst [vmem:[%s207 + $0xe8] sm:$0xff] %v436
        %469 = vst [vmem:[%s207 + $0xf0] sm:$0xff] %v437
        %470 = vst [vmem:[%s207 + $0xf8] sm:$0xff] %v438
        %s471 = sand.u32 %s97, 1
        %s472 = scalar_lea.sflag [#allocation4], %s471
        %s473 = sand.u32 %s97, 1
        %s474 = smul.addr %s473, 256
        %s475 = scalar_lea.vmem [#allocation7], %s474
        // Predicated region
        $region41: #{tpu_custom_call.1} parent=31 // pred_check
          %p476 = pneg %p107
        $region42: #{tpu_custom_call.1} parent=31 // pred_check_branch
          %478 = sbr.rel (%p476) target = $region44
        $region43: #{tpu_custom_call.1} parent=31 // pred_region
          %s479 = smul.u32 32, %s21
          %481 = vsyncadd %s472, 0
          %s482 = smul.addr %s479, 8
          %s483 = scalar_lea.hbm %s3, %s482
          %s484 = sshll.u32 %s475, 4
          %s485 = int_to_ptr.vmem [resolvable:$true] %s484
          %s486 = sshll.u32 %s483, 4
          %s487 = int_to_ptr.hbm [resolvable:$true] %s486
          %492 = dma.vmem_to_hbm [thread:$0]  %s485, 4096, %s487, %s472, 128, 128, 8
        $region44: #{tpu_custom_call.1} parent=31 // pred_fallthru
          _
      $region32: #{tpu_custom_call.1} parent=5 // pred_fallthru
        _
      %p493 = scmp.le.s32.totalorder 2, %s16
      // Predicated region
      $region45: #{tpu_custom_call.1} parent=5 // pred_check
        %p494 = pneg %p493
      $region46: #{tpu_custom_call.1} parent=5 // pred_check_branch
        %496 = sbr.rel (%p494) target = $region48
      $region47: #{tpu_custom_call.1} parent=5 // pred_region
        %s497 = ssub.s32 %s16, 2
        // Predicated region
        $region49: #{tpu_custom_call.1} parent=47 // pred_check
          %p498 = pneg %p113
        $region50: #{tpu_custom_call.1} parent=47 // pred_check_branch
          %500 = sbr.rel (%p498) target = $region52
        $region51: #{tpu_custom_call.1} parent=47 // pred_region
          %s501 = sand.u32 %s98, 1
          %s502 = scalar_lea.sflag [#allocation4], %s501
          %s503 = sand.u32 %s98, 1
          %s504 = smul.addr %s503, 256
          %s505 = scalar_lea.vmem [#allocation7], %s504
          %507 = dma.done %s502, 4096
        $region52: #{tpu_custom_call.1} parent=47 // pred_fallthru
          _
      $region48: #{tpu_custom_call.1} parent=5 // pred_fallthru
        _
    $region6: #{tpu_custom_call.1} parent=1 // loop_footer
      %s20 = sadd.s32 1, %s16
    $region7: #{tpu_custom_call.1} parent=1 // loop_footer_branch
      %15 = sbr.rel target = $region3
    $region8: #{tpu_custom_call.1} parent=1 // loop_exit
      _
    %508 = vsyncpa [#allocation3], 1
    %s509 = scalar_lea.sflag [#allocation3], 1
    %510 = vsyncpa %s509, 1
    %511 = vsyncpa [#allocation6], 1
    %512 = vsyncpa [#allocation4], 1
    %s513 = scalar_lea.sflag [#allocation4], 1
    %514 = vsyncpa %s513, 1

</llo_original>
